<compile_context>
chip_gen: v5e
topology: v5e:2x2
jax: 0.10.0
libtpu: 0.0.40
codegen_flags: <defaults>
</compile_context>

<pallas_src>
import math
from functools import partial

import jax
import jax.numpy as jnp
from jax.experimental import pallas as pl
from jax.experimental.pallas import tpu as pltpu


def _mlp_kernel(x_ref, w1_ref, b1_ref, w2_ref, b2_ref, o_ref, acc_ref):
    # x_ref:  (tm, C)    row tile of flattened tokens (compute dtype)
    # w1_ref: (C, th)    c_fc weight slice (in, out)
    # b1_ref: (1, th)    c_fc bias slice (f32)
    # w2_ref: (th, C)    c_proj weight slice (in, out)
    # b2_ref: (1, C)     c_proj bias (f32)
    # o_ref:  (tm, C)    output tile
    # acc_ref:(tm, C)    f32 accumulator (VMEM scratch), resident across h axis
    h_idx = pl.program_id(1)

    @pl.when(h_idx == 0)
    def _init():
        acc_ref[...] = jnp.zeros_like(acc_ref)

    # c_fc chunk: (tm, C) @ (C, th) on the MXU, f32 accumulation.
    h = jnp.dot(x_ref[...], w1_ref[...], preferred_element_type=jnp.float32)
    h = h + b1_ref[...].astype(jnp.float32)

    # Exact GELU in f32 (matches torch.nn.GELU() default: 0.5*x*(1+erf(x/sqrt(2)))).
    h = 0.5 * h * (1.0 + jax.lax.erf(h * jnp.float32(1.0 / math.sqrt(2.0))))

    # c_proj chunk: accumulate (tm, th) @ (th, C) into the f32 accumulator.
    acc_ref[...] += jnp.dot(h.astype(w2_ref.dtype), w2_ref[...],
                            preferred_element_type=jnp.float32)

    @pl.when(h_idx == pl.num_programs(1) - 1)
    def _finalize():
        o_ref[...] = (acc_ref[...] + b2_ref[...].astype(jnp.float32)).astype(o_ref.dtype)


@partial(jax.jit, static_argnames=("tm", "th", "compute_dtype"))
def mlp_pallas(x, w1, b1, w2, b2, *, tm=256, th=512, compute_dtype=jnp.bfloat16):
    """x: (B, T, C) -> (B, T, C). Weights are (in, out), biases (out,)."""
    B, T, C = x.shape
    H = w1.shape[1]  # 4*C
    M = B * T
    out_dtype = x.dtype

    x2 = x.reshape(M, C)

    # Row tiling (pad rows up to the tile if needed).
    tm_eff = min(tm, M)
    M_pad = -(-M // tm_eff) * tm_eff
    if M_pad != M:
        x2 = jnp.pad(x2, ((0, M_pad - M), (0, 0)))

    # Hidden-dim streaming (pad hidden dim with zeros: GELU(0)=0 contributes nothing).
    th_eff = min(th, H)
    H_pad = -(-H // th_eff) * th_eff
    if H_pad != H:
        w1 = jnp.pad(w1, ((0, 0), (0, H_pad - H)))
        b1 = jnp.pad(b1, ((0, H_pad - H),))
        w2 = jnp.pad(w2, ((0, H_pad - H), (0, 0)))

    # bf16 MXU operands (f32 accumulation inside the kernel); biases stay f32.
    x2 = x2.astype(compute_dtype)
    w1c = w1.astype(compute_dtype)
    w2c = w2.astype(compute_dtype)
    b1r = b1.reshape(1, H_pad).astype(jnp.float32)
    b2r = b2.reshape(1, C).astype(jnp.float32)

    grid = (M_pad // tm_eff, H_pad // th_eff)

    itemsize_c = jnp.dtype(compute_dtype).itemsize
    itemsize_o = jnp.dtype(out_dtype).itemsize

    # Explicit scoped-VMEM budget from the actual tile footprint (double-buffered
    # pipelined operands + accumulator + GELU-chunk headroom), capped for v7x.
    vmem_needed = (
        2 * tm_eff * C * itemsize_c          # x tile
        + 2 * tm_eff * C * itemsize_o        # out tile
        + 2 * C * th_eff * itemsize_c        # W1 slice
        + 2 * th_eff * C * itemsize_c        # W2 slice
        + 2 * (th_eff + C) * 4               # bias slices
        + tm_eff * C * 4                     # f32 accumulator scratch
        + tm_eff * th_eff * 4                # GELU intermediate headroom
    )
    vmem_limit = int(min(max(32 * 1024 * 1024, 2 * vmem_needed),
                         56 * 1024 * 1024))

    cost = pl.CostEstimate(
        flops=4 * M * C * H,                 # two matmuls, 2 flops per MAC
        transcendentals=M * H,               # one erf per hidden activation
        bytes_accessed=(M * C * itemsize_c + C * H * itemsize_c
                        + H * C * itemsize_c + (H + C) * 4
                        + M * C * itemsize_o),
    )

    out = pl.pallas_call(
        _mlp_kernel,
        out_shape=jax.ShapeDtypeStruct((M_pad, C), out_dtype),
        grid_spec=pltpu.PrefetchScalarGridSpec(
            num_scalar_prefetch=0,
            grid=grid,
            in_specs=[
                pl.BlockSpec((tm_eff, C), lambda i, h: (i, 0)),    # x row tile
                pl.BlockSpec((C, th_eff), lambda i, h: (0, h)),    # W1 slice
                pl.BlockSpec((1, th_eff), lambda i, h: (0, h)),    # b1 slice
                pl.BlockSpec((th_eff, C), lambda i, h: (h, 0)),    # W2 slice
                pl.BlockSpec((1, C), lambda i, h: (0, 0)),         # b2
            ],
            out_specs=pl.BlockSpec((tm_eff, C), lambda i, h: (i, 0)),
            scratch_shapes=[pltpu.VMEM((tm_eff, C), jnp.float32)],
        ),
        compiler_params=pltpu.CompilerParams(
            dimension_semantics=("parallel", "arbitrary"),
            vmem_limit_bytes=vmem_limit,
        ),
        cost_estimate=cost,
    )(x2, w1c, b1r, w2c, b2r)

    if M_pad != M:
        out = out[:M]
    return out.reshape(B, T, C)


def mlp_reference(x, w1, b1, w2, b2):
    h = x @ w1 + b1
    h = jax.nn.gelu(h, approximate=False)
    return h @ w2 + b2


if __name__ == "__main__":
    # model_config.n_embd = 32 ; batch = 2 ; seq = 8
    B, T, C = 2, 8, 32
    H = 4 * C

    key = jax.random.PRNGKey(0)
    kx, kw1, kb1, kw2, kb2 = jax.random.split(key, 5)

    # Deterministic init mimicking nn.Linear's U(-1/sqrt(fan_in), 1/sqrt(fan_in)).
    bound1 = 1.0 / math.sqrt(C)
    bound2 = 1.0 / math.sqrt(H)
    x = jax.random.normal(kx, (B, T, C), dtype=jnp.float32)
    w1 = jax.random.uniform(kw1, (C, H), minval=-bound1, maxval=bound1, dtype=jnp.float32)
    b1 = jax.random.uniform(kb1, (H,), minval=-bound1, maxval=bound1, dtype=jnp.float32)
    w2 = jax.random.uniform(kw2, (H, C), minval=-bound2, maxval=bound2, dtype=jnp.float32)
    b2 = jax.random.uniform(kb2, (C,), minval=-bound2, maxval=bound2, dtype=jnp.float32)

    y_ref = mlp_reference(x, w1, b1, w2, b2)

    # Default fast path: bf16 MXU operands, f32 accumulation / GELU.
    y_bf16 = jax.block_until_ready(mlp_pallas(x, w1, b1, w2, b2))
    assert y_bf16.shape == (B, T, C)
    assert jnp.allclose(y_bf16, y_ref, atol=1e-1, rtol=1e-1), "bf16 path mismatch"

    # f32 path is numerically exact vs the reference.
    y_f32 = jax.block_until_ready(
        mlp_pallas(x, w1, b1, w2, b2, compute_dtype=jnp.float32))
    assert jnp.allclose(y_f32, y_ref, atol=1e-5, rtol=1e-5), "f32 path mismatch"

    print("KERNEL_OK")
</pallas_src>

<mosaic_0001>
module attributes {stable_mosaic.version = 11 : i64} {
  func.func @_mlp_kernel(%arg0: i32, %arg1: i32, %arg2: memref<16x32xbf16, #tpu.memory_space<vmem>>, %arg3: memref<32x128xbf16, #tpu.memory_space<vmem>>, %arg4: memref<1x128xf32, #tpu.memory_space<vmem>>, %arg5: memref<128x32xbf16, #tpu.memory_space<vmem>>, %arg6: memref<1x32xf32, #tpu.memory_space<vmem>>, %arg7: memref<16x32xf32, #tpu.memory_space<vmem>>, %arg8: memref<16x32xf32, #tpu.memory_space<vmem>>) attributes {dimension_semantics = [#tpu.dimension_semantics<parallel>, #tpu.dimension_semantics<arbitrary>], iteration_bounds = array<i64: 1, 1>, scalar_prefetch = 0 : i64, scratch_operands = 1 : i64, tpu.core_type = #tpu.core_type<tc>, window_params = [{transform_indices = @transform_0, window_bounds = array<i64: 16, 32>}, {transform_indices = @transform_1, window_bounds = array<i64: 32, 128>}, {transform_indices = @transform_2, window_bounds = array<i64: 1, 128>}, {transform_indices = @transform_3, window_bounds = array<i64: 128, 32>}, {pipeline_mode = #tpu.pipeline_mode<synchronous>, transform_indices = @transform_4, window_bounds = array<i64: 1, 32>}, {transform_indices = @transform_5, window_bounds = array<i64: 16, 32>}]} {
    %c0_i32 = arith.constant 0 : i32
    %0 = arith.cmpi eq, %arg1, %c0_i32 : i32
    %1 = arith.extui %0 : i1 to i32
    %c0_i32_0 = arith.constant 0 : i32
    %2 = arith.cmpi ne, %1, %c0_i32_0 : i32
    scf.if %2 {
      %cst_18 = arith.constant 0.000000e+00 : f32
      %26 = vector.broadcast %cst_18 : f32 to vector<16x32xf32>
      %c0_19 = arith.constant 0 : index
      %c0_20 = arith.constant 0 : index
      %27 = vector.load %arg8[%c0_19, %c0_20] : memref<16x32xf32, #tpu.memory_space<vmem>>, vector<16x32xf32>
      tpu.vector_store %arg8[%c0_19, %c0_20], %26 {strides = array<i32>} : memref<16x32xf32, #tpu.memory_space<vmem>>, vector<16x32xf32>,
    } else {
    }
    %c0 = arith.constant 0 : index
    %c0_1 = arith.constant 0 : index
    %3 = vector.load %arg2[%c0, %c0_1] : memref<16x32xbf16, #tpu.memory_space<vmem>>, vector<16x32xbf16>
    %c0_2 = arith.constant 0 : index
    %c0_3 = arith.constant 0 : index
    %4 = vector.load %arg3[%c0_2, %c0_3] : memref<32x128xbf16, #tpu.memory_space<vmem>>, vector<32x128xbf16>
    %cst = arith.constant dense<0.000000e+00> : vector<16x128xf32>
    %5 = tpu.matmul %3, %4, %cst {dimension_numbers = #tpu.dot_dimension_numbers<[1], [0], [0], [1], [0, 0, 1, 1], [], []>} : vector<16x32xbf16>, vector<32x128xbf16>, vector<16x128xf32> -> vector<16x128xf32>
    %c0_4 = arith.constant 0 : index
    %c0_5 = arith.constant 0 : index
    %6 = vector.load %arg4[%c0_4, %c0_5] : memref<1x128xf32, #tpu.memory_space<vmem>>, vector<1x128xf32>
    %7 = vector.broadcast %6 : vector<1x128xf32> to vector<16x128xf32>
    %8 = arith.addf %5, %7 : vector<16x128xf32>
    %cst_6 = arith.constant 5.000000e-01 : f32
    %9 = vector.broadcast %cst_6 : f32 to vector<16x128xf32>
    %10 = arith.mulf %9, %8 : vector<16x128xf32>
    %cst_7 = arith.constant 0.707106769 : f32
    %11 = vector.broadcast %cst_7 : f32 to vector<16x128xf32>
    %12 = arith.mulf %8, %11 : vector<16x128xf32>
    %13 = math.erf %12 : vector<16x128xf32>
    %cst_8 = arith.constant 1.000000e+00 : f32
    %14 = vector.broadcast %cst_8 : f32 to vector<16x128xf32>
    %15 = arith.addf %14, %13 : vector<16x128xf32>
    %16 = arith.mulf %10, %15 : vector<16x128xf32>
    %c0_9 = arith.constant 0 : index
    %c0_10 = arith.constant 0 : index
    %17 = vector.load %arg8[%c0_9, %c0_10] : memref<16x32xf32, #tpu.memory_space<vmem>>, vector<16x32xf32>
    %18 = arith.truncf %16 : vector<16x128xf32> to vector<16x128xbf16>
    %c0_11 = arith.constant 0 : index
    %c0_12 = arith.constant 0 : index
    %19 = vector.load %arg5[%c0_11, %c0_12] : memref<128x32xbf16, #tpu.memory_space<vmem>>, vector<128x32xbf16>
    %cst_13 = arith.constant dense<0.000000e+00> : vector<16x32xf32>
    %20 = tpu.matmul %18, %19, %cst_13 {dimension_numbers = #tpu.dot_dimension_numbers<[1], [0], [0], [1], [0, 0, 1, 1], [], []>} : vector<16x128xbf16>, vector<128x32xbf16>, vector<16x32xf32> -> vector<16x32xf32>
    %21 = arith.addf %17, %20 : vector<16x32xf32>
    %c0_14 = arith.constant 0 : index
    %c0_15 = arith.constant 0 : index
    %22 = vector.load %arg8[%c0_14, %c0_15] : memref<16x32xf32, #tpu.memory_space<vmem>>, vector<16x32xf32>
    tpu.vector_store %arg8[%c0_14, %c0_15], %21 {strides = array<i32>} : memref<16x32xf32, #tpu.memory_space<vmem>>, vector<16x32xf32>,
    %c0_i32_16 = arith.constant 0 : i32
    %23 = arith.cmpi eq, %arg1, %c0_i32_16 : i32
    %24 = arith.extui %23 : i1 to i32
    %c0_i32_17 = arith.constant 0 : i32
    %25 = arith.cmpi ne, %24, %c0_i32_17 : i32
    scf.if %25 {
      %c0_18 = arith.constant 0 : index
      %c0_19 = arith.constant 0 : index
      %26 = vector.load %arg8[%c0_18, %c0_19] : memref<16x32xf32, #tpu.memory_space<vmem>>, vector<16x32xf32>
      %c0_20 = arith.constant 0 : index
      %c0_21 = arith.constant 0 : index
      %27 = vector.load %arg6[%c0_20, %c0_21] : memref<1x32xf32, #tpu.memory_space<vmem>>, vector<1x32xf32>
      %28 = vector.broadcast %27 : vector<1x32xf32> to vector<16x32xf32>
      %29 = arith.addf %26, %28 : vector<16x32xf32>
      %c0_22 = arith.constant 0 : index
      %c0_23 = arith.constant 0 : index
      %30 = vector.load %arg7[%c0_22, %c0_23] : memref<16x32xf32, #tpu.memory_space<vmem>>, vector<16x32xf32>
      tpu.vector_store %arg7[%c0_22, %c0_23], %29 {strides = array<i32>} : memref<16x32xf32, #tpu.memory_space<vmem>>, vector<16x32xf32>,
    } else {
    }
    return
  }
  func.func @transform_0(%arg0: i32, %arg1: i32) -> (i32, i32) {
    %c0_i32 = arith.constant 0 : i32
    %c0_i32_0 = arith.constant 0 : i32
    return %arg0, %c0_i32 : i32, i32
  }
  func.func @transform_1(%arg0: i32, %arg1: i32) -> (i32, i32) {
    %c0_i32 = arith.constant 0 : i32
    %c0_i32_0 = arith.constant 0 : i32
    return %c0_i32, %arg1 : i32, i32
  }
  func.func @transform_2(%arg0: i32, %arg1: i32) -> (i32, i32) {
    %c0_i32 = arith.constant 0 : i32
    %c0_i32_0 = arith.constant 0 : i32
    return %c0_i32, %arg1 : i32, i32
  }
  func.func @transform_3(%arg0: i32, %arg1: i32) -> (i32, i32) {
    %c0_i32 = arith.constant 0 : i32
    %c0_i32_0 = arith.constant 0 : i32
    return %arg1, %c0_i32 : i32, i32
  }
  func.func @transform_4(%arg0: i32, %arg1: i32) -> (i32, i32) {
    %c0_i32 = arith.constant 0 : i32
    %c0_i32_0 = arith.constant 0 : i32
    %c0_i32_1 = arith.constant 0 : i32
    return %c0_i32, %c0_i32_0 : i32, i32
  }
  func.func @transform_5(%arg0: i32, %arg1: i32) -> (i32, i32) {
    %c0_i32 = arith.constant 0 : i32
    %c0_i32_0 = arith.constant 0 : i32
    return %arg0, %c0_i32 : i32, i32
  }
}

</mosaic_0001>

<llo_original>
// kernel: mlp_pallas.1
$region0: #{mlp_pallas.1}
  #allocation0 [shape = 'u32[]', space=smem, size = 0x4, offset = 0x4, fixed_abs, tag = 'smem constant byte address 0x4 - core index']
  #allocation1 [shape = 'u32[72,128]{1,0:T(1,128)}', space=vmem, size = 0x9000, scoped, tag = 'internal scratch']
  #allocation2 [shape = 'f32[16,32]{1,0:T(8,128)}', space=vmem, size = 0x2000, scoped, tag = 'scratch operand']
  %s0 = inlined_call_operand.vmem [shape: bf16[16,32], index: 0, kind: input, shape index: {}]
  %s1 = inlined_call_operand.vmem [shape: bf16[32,128], index: 1, kind: input, shape index: {}]
  %s2 = inlined_call_operand.vmem [shape: f32[1,128], index: 2, kind: input, shape index: {}]
  %s3 = inlined_call_operand.vmem [shape: bf16[128,32], index: 3, kind: input, shape index: {}]
  %s4 = inlined_call_operand.vmem [shape: f32[1,32], index: 4, kind: input, shape index: {}]
  %s5 = inlined_call_operand.hbm [shape: f32[16,32], index: 5, kind: output, shape index: {}]
  %s6 = sld [smem:[#allocation0]]
  $region38: #{mlp_pallas.1} parent=0
    _
  %s8 = ssub.s32 1, %s6
  %s9 = scalar_select 0, %s8, %s6
  $region1: #{mlp_pallas.1} parent=0
    #allocation3 [shape = 'u8[8192]{0}', space=vmem, size = 0x2000, scoped, tag = 'output window, operand 0, single buffered']
    #allocation4 [shape = 's32[1]{0}', space=sflag, size = 0x4, scoped, tag = 'scoped memory for mlp_pallas.1']
    %10 = vsyncpa [#allocation4], 0
    // Predicated region
    $region2: #{mlp_pallas.1} parent=1 // pred_check
      _
    $region3: #{mlp_pallas.1} parent=1 // pred_check_branch
      %12 = sbr.rel (0) target = $region5
    $region4: #{mlp_pallas.1} parent=1 // pred_region
      _
    $region5: #{mlp_pallas.1} parent=1 // pred_fallthru
      _
    // Predicated region
    $region6: #{mlp_pallas.1} parent=1 // pred_check
      _
    $region7: #{mlp_pallas.1} parent=1 // pred_check_branch
      %14 = sbr.rel (0) target = $region9
    $region8: #{mlp_pallas.1} parent=1 // pred_region
      _
    $region9: #{mlp_pallas.1} parent=1 // pred_fallthru
      _
    // Predicated region
    $region10: #{mlp_pallas.1} parent=1 // pred_check
      _
    $region11: #{mlp_pallas.1} parent=1 // pred_check_branch
      %16 = sbr.rel (0) target = $region13
    $region12: #{mlp_pallas.1} parent=1 // pred_region
      _
    $region13: #{mlp_pallas.1} parent=1 // pred_fallthru
      _
    // Predicated region
    $region14: #{mlp_pallas.1} parent=1 // pred_check
      _
    $region15: #{mlp_pallas.1} parent=1 // pred_check_branch
      %18 = sbr.rel (0) target = $region17
    $region16: #{mlp_pallas.1} parent=1 // pred_region
      _
    $region17: #{mlp_pallas.1} parent=1 // pred_fallthru
      _
    // Predicated region
    $region18: #{mlp_pallas.1} parent=1 // pred_check
      _
    $region19: #{mlp_pallas.1} parent=1 // pred_check_branch
      %20 = sbr.rel (0) target = $region21
    $region20: #{mlp_pallas.1} parent=1 // pred_region
      _
    $region21: #{mlp_pallas.1} parent=1 // pred_fallthru
      _
    %p22 = scmp.eq.s32.totalorder 0, 0
    // Predicated region
    $region22: #{mlp_pallas.1} parent=1 // pred_check
      %p23 = pneg %p22
    $region23: #{mlp_pallas.1} parent=1 // pred_check_branch
      %25 = sbr.rel (%p23) target = $region25
    $region24: #{mlp_pallas.1} parent=1 // pred_region
      %vm26 = vcmask 261120
      %27 = vst.msk [vmem:[#allocation2] sm:$0xff] %vm26, 0.0
      %28 = vst.msk [vmem:[#allocation2 + $0x8] sm:$0xff] %vm26, 0.0
    $region25: #{mlp_pallas.1} parent=1 // pred_fallthru
      _
    %v29 = vld [vmem:[%s0] sm:$0xf]
    %v30 = vld [vmem:[%s0 + $0x4] sm:$0xf]
    %v31 = vld [vmem:[%s1] sm:$0xf]
    %v32 = vld [vmem:[%s1 + $0x4] sm:$0xf]
    %v33 = vld [vmem:[%s1 + $0x8] sm:$0xf]
    %v34 = vld [vmem:[%s1 + $0xc] sm:$0xf]
    %v35 = vld [vmem:[%s2] sm:$0x1]
    %v37 = vperm.slane %v35, 0
    %v41 = vunpack.c.l.b16 %v29
    %v42 = vunpack.c.l.b16 %v30
    %v43 = vpack.c.b16 %v42, %v41
    %v48 = vunpack.c.l.b16 %v31
    %v49 = vunpack.c.l.b16 %v32
    %v50 = vunpack.c.l.b16 %v33
    %v51 = vunpack.c.l.b16 %v34
    %v52 = vpack.c.b16 %v49, %v48
    %v53 = vpack.c.b16 %v51, %v50
    %vm56 = vcmask 261120
    %v58 = vsel %vm56, %v43, 0
    %60 = vmatpush.bf16.msra.mxu0 0
    %61 = vmatpush.bf16.msra.mxu0 0
    %62 = vmatpush.bf16.msra.mxu0 0
    %63 = vmatpush.bf16.msra.mxu0 0
    %64 = vmatpush.bf16.msra.mxu0 0
    %65 = vmatpush.bf16.msra.mxu0 0
    %66 = vmatpush.bf16.msra.mxu0 %v53
    %67 = vmatpush.bf16.msra.mxu0 %v52
    %68 = vmatmul.bf16.gmra.mxu0 %v58
    %v69 = vpop.f32.mrf.mxu0
    %v70 = vadd.f32 %v37, %v69
    %v71 = vpop.f32.mrf.mxu0
    %v72 = vadd.f32 %v37, %v71
    %73 = vdwg.mxu0
    %v74 = vmul.f32 %v70, 0.5
    %v75 = vmul.f32 %v72, 0.5
    %v76 = vmul.f32 %v70, 0.70710677
    %v77 = vmul.f32 %v72, 0.70710677
    %v78 = vmul.f32 %v76, %v76
    %v79 = vmin.f32 16.0, %v78
    %v80 = vmul.f32 %v79, 2.1237322e-06
    %v81 = vadd.f32 %v80, 0.00028619796
    %v82 = vmul.f32 %v79, %v81
    %v83 = vadd.f32 %v82, 0.0036580483
    %v84 = vmul.f32 %v79, %v83
    %v85 = vadd.f32 %v84, 0.05243302
    %v86 = vmul.f32 %v79, %v85
    %v87 = vadd.f32 %v86, 0.18741608
    %v88 = vmul.f32 %v79, %v87
    %v89 = vadd.f32 %v88, 1.1283791
    %v90 = vmul.f32 %v76, %v89
    %v91 = vmul.f32 %v79, 3.8918573e-05
    %v92 = vadd.f32 %v91, 0.001143296
    %v93 = vmul.f32 %v79, %v92
    %v94 = vadd.f32 %v93, 0.014752088
    %v95 = vmul.f32 %v79, %v94
    %v96 = vadd.f32 %v95, 0.112945676
    %v97 = vmul.f32 %v79, %v96
    %v98 = vadd.f32 %v97, 0.4994258
    %v99 = vmul.f32 %v79, %v98
    %v100 = vadd.f32 %v99, 1.0
    %v101 = vrcp.pop %v100
    %v102 = vmul.f32 %v100, %v101
    %v103 = vsub.f32 1.0, %v102
    %v104 = vmul.f32 %v101, %v103
    %v105 = vadd.f32 %v101, %v104
    %vm106 = vweird.f32 %v100
    %vm107 = vweird.f32 %v101
    %vm108 = vmor %vm106, %vm107
    %v109 = vsel %vm108, %v101, %v105
    %v110 = vand.u32 2147483647, %v100
    %vm111 = vcmp.eq.f32.partialorder %v110, 8.507059e+37
    %v112 = vand.u32 %v100, 2147483648
    %v113 = vor.u32 1.1754944e-38, %v112
    %v114 = vsel %vm111, %v113, %v109
    %v115 = vmul.f32 %v90, %v114
    %v116 = vmin.f32 %v115, 1.0
    %v117 = vmax.f32 %v116, -1.0
    %v118 = vmul.f32 %v77, %v77
    %v119 = vmin.f32 16.0, %v118
    %v120 = vmul.f32 %v119, 2.1237322e-06
    %v121 = vadd.f32 %v120, 0.00028619796
    %v122 = vmul.f32 %v119, %v121
    %v123 = vadd.f32 %v122, 0.0036580483
    %v124 = vmul.f32 %v119, %v123
    %v125 = vadd.f32 %v124, 0.05243302
    %v126 = vmul.f32 %v119, %v125
    %v127 = vadd.f32 %v126, 0.18741608
    %v128 = vmul.f32 %v119, %v127
    %v129 = vadd.f32 %v128, 1.1283791
    %v130 = vmul.f32 %v77, %v129
    %v131 = vmul.f32 %v119, 3.8918573e-05
    %v132 = vadd.f32 %v131, 0.001143296
    %v133 = vmul.f32 %v119, %v132
    %v134 = vadd.f32 %v133, 0.014752088
    %v135 = vmul.f32 %v119, %v134
    %v136 = vadd.f32 %v135, 0.112945676
    %v137 = vmul.f32 %v119, %v136
    %v138 = vadd.f32 %v137, 0.4994258
    %v139 = vmul.f32 %v119, %v138
    %v140 = vadd.f32 %v139, 1.0
    %v141 = vrcp.pop %v140
    %v142 = vmul.f32 %v140, %v141
    %v143 = vsub.f32 1.0, %v142
    %v144 = vmul.f32 %v141, %v143
    %v145 = vadd.f32 %v141, %v144
    %vm146 = vweird.f32 %v140
    %vm147 = vweird.f32 %v141
    %vm148 = vmor %vm146, %vm147
    %v149 = vsel %vm148, %v141, %v145
    %v150 = vand.u32 2147483647, %v140
    %vm151 = vcmp.eq.f32.partialorder %v150, 8.507059e+37
    %v152 = vand.u32 %v140, 2147483648
    %v153 = vor.u32 1.1754944e-38, %v152
    %v154 = vsel %vm151, %v153, %v149
    %v155 = vmul.f32 %v130, %v154
    %v156 = vmin.f32 %v155, 1.0
    %v157 = vmax.f32 %v156, -1.0
    %v158 = vadd.f32 %v117, 1.0
    %v159 = vadd.f32 %v157, 1.0
    %v160 = vmul.f32 %v74, %v158
    %v161 = vmul.f32 %v75, %v159
    %v162 = vld [vmem:[#allocation2] sm:$0xff]
    %v163 = vld [vmem:[#allocation2 + $0x8] sm:$0xff]
    %v164 = vpack.c.bf16 %v161, %v160
    %v165 = vld [vmem:[%s3] sm:$0xf]
    %v166 = vld [vmem:[%s3 + $0x4] sm:$0xf]
    %v167 = vld [vmem:[%s3 + $0x8] sm:$0xf]
    %v168 = vld [vmem:[%s3 + $0xc] sm:$0xf]
    %v169 = vld [vmem:[%s3 + $0x10] sm:$0xf]
    %v170 = vld [vmem:[%s3 + $0x14] sm:$0xf]
    %v171 = vld [vmem:[%s3 + $0x18] sm:$0xf]
    %v172 = vld [vmem:[%s3 + $0x1c] sm:$0xf]
    %v173 = vld [vmem:[%s3 + $0x20] sm:$0xf]
    %v174 = vld [vmem:[%s3 + $0x24] sm:$0xf]
    %v175 = vld [vmem:[%s3 + $0x28] sm:$0xf]
    %v176 = vld [vmem:[%s3 + $0x2c] sm:$0xf]
    %v177 = vld [vmem:[%s3 + $0x30] sm:$0xf]
    %v178 = vld [vmem:[%s3 + $0x34] sm:$0xf]
    %v179 = vld [vmem:[%s3 + $0x38] sm:$0xf]
    %v180 = vld [vmem:[%s3 + $0x3c] sm:$0xf]
    %v197 = vunpack.c.l.b16 %v165
    %v198 = vunpack.c.l.b16 %v166
    %v199 = vunpack.c.l.b16 %v167
    %v200 = vunpack.c.l.b16 %v168
    %v201 = vunpack.c.l.b16 %v169
    %v202 = vunpack.c.l.b16 %v170
    %v203 = vunpack.c.l.b16 %v171
    %v204 = vunpack.c.l.b16 %v172
    %v205 = vunpack.c.l.b16 %v173
    %v206 = vunpack.c.l.b16 %v174
    %v207 = vunpack.c.l.b16 %v175
    %v208 = vunpack.c.l.b16 %v176
    %v209 = vunpack.c.l.b16 %v177
    %v210 = vunpack.c.l.b16 %v178
    %v211 = vunpack.c.l.b16 %v179
    %v212 = vunpack.c.l.b16 %v180
    %v213 = vpack.c.b16 %v198, %v197
    %v214 = vpack.c.b16 %v200, %v199
    %v215 = vpack.c.b16 %v202, %v201
    %v216 = vpack.c.b16 %v204, %v203
    %v217 = vpack.c.b16 %v206, %v205
    %v218 = vpack.c.b16 %v208, %v207
    %v219 = vpack.c.b16 %v210, %v209
    %v220 = vpack.c.b16 %v212, %v211
    %229 = vmatpush.bf16.msra.mxu0 %v220
    %230 = vmatpush.bf16.msra.mxu0 %v219
    %231 = vmatpush.bf16.msra.mxu0 %v218
    %232 = vmatpush.bf16.msra.mxu0 %v217
    %233 = vmatpush.bf16.msra.mxu0 %v216
    %234 = vmatpush.bf16.msra.mxu0 %v215
    %235 = vmatpush.bf16.msra.mxu0 %v214
    %236 = vmatpush.bf16.msra.mxu0 %v213
    %237 = vmatmul.bf16.gmra.mxu0 %v164
    %v238 = vpop.f32.mrf.mxu0
    %v239 = vadd.f32 0.0, %v238
    %v240 = vpop.f32.mrf.mxu0
    %v241 = vadd.f32 0.0, %v240
    %242 = vdwg.mxu0
    %v243 = vadd.f32 %v162, %v239
    %v244 = vadd.f32 %v163, %v241
    %245 = vst.msk [vmem:[#allocation2] sm:$0xff] %vm56, %v243
    %246 = vst.msk [vmem:[#allocation2 + $0x8] sm:$0xff] %vm56, %v244
    // Predicated region
    $region26: #{mlp_pallas.1} parent=1 // pred_check
      %p247 = pneg %p22
    $region27: #{mlp_pallas.1} parent=1 // pred_check_branch
      %249 = sbr.rel (%p247) target = $region29
    $region28: #{mlp_pallas.1} parent=1 // pred_region
      %v250 = vld [vmem:[#allocation2] sm:$0xff]
      %v251 = vld [vmem:[#allocation2 + $0x8] sm:$0xff]
      %v252 = vld [vmem:[%s4] sm:$0x1]
      %v254 = vperm.slane %v252, 0
      %v256 = vadd.f32 %v250, %v254
      %v257 = vadd.f32 %v251, %v254
      %258 = vst.msk [vmem:[#allocation3] sm:$0xff] %vm56, %v256
      %259 = vst.msk [vmem:[#allocation3 + $0x8] sm:$0xff] %vm56, %v257
    $region29: #{mlp_pallas.1} parent=1 // pred_fallthru
      _
    // Predicated region
    $region30: #{mlp_pallas.1} parent=1 // pred_check
      _
    $region31: #{mlp_pallas.1} parent=1 // pred_check_branch
      %261 = sbr.rel (0) target = $region33
    $region32: #{mlp_pallas.1} parent=1 // pred_region
      %263 = vsyncadd [#allocation4], 0
      %s264 = sshll.u32 [#allocation3], 4
      %s265 = int_to_ptr.vmem [resolvable:$true] %s264
      %s266 = sshll.u32 %s5, 4
      %s267 = int_to_ptr.hbm [resolvable:$true] %s266
      %272 = dma.vmem_to_hbm [thread:$0]  %s265, 256, %s267, [#allocation4], 128, 128, 8
    $region33: #{mlp_pallas.1} parent=1 // pred_fallthru
      _
    // Predicated region
    $region34: #{mlp_pallas.1} parent=1 // pred_check
      _
    $region35: #{mlp_pallas.1} parent=1 // pred_check_branch
      %274 = sbr.rel (0) target = $region37
    $region36: #{mlp_pallas.1} parent=1 // pred_region
      %276 = dma.done [#allocation4], 256
    $region37: #{mlp_pallas.1} parent=1 // pred_fallthru
      _
    %277 = vsyncpa [#allocation4], 1

</llo_original>
